<compile_context>
chip_gen: v7x
topology: tpu7x:2x2x1
jax: 0.10.0
libtpu: 0.0.40
codegen_flags: <defaults>
</compile_context>

<pallas_src>
import jax
import jax.numpy as jnp
from jax import lax
from jax.experimental import pallas as pl
from jax.experimental.pallas import tpu as pltpu


def _round_up(x, m):
    return (x + m - 1) // m * m


def _cdiv(a, b):
    return -(-a // b)


# ---------------------------------------------------------------------------
# Kernels
# ---------------------------------------------------------------------------
def _make_bins_kernel(C, P, bps, n_blocks):
    """71-bin path.

    Grid: (N, P, bps) -- images x parallel lane-block slices x blocks/slice.
    Refs:
      p_ref : (C, TS) logits block (C on sublanes, TS lanes of pixels)
      g_ref : (1, TS) gt depth block (zero-padded lanes fail the gt>=4 mask)
      sum_ref, cnt_ref : (1, 1) per-(n, p) partial outputs
      acc_sum, acc_cnt : (1, TS) VMEM running elementwise partials
    """
    needs_valid = (P * bps != n_blocks)

    def kernel(p_ref, g_ref, sum_ref, cnt_ref, acc_sum, acc_cnt):
        p_id = pl.program_id(1)
        i = pl.program_id(2)

        @pl.when(i == 0)
        def _():
            acc_sum[...] = jnp.zeros_like(acc_sum)
            acc_cnt[...] = jnp.zeros_like(acc_cnt)

        def compute():
            p = p_ref[...].astype(jnp.float32)          # (C, TS)
            g = g_ref[...].astype(jnp.float32)          # (1, TS)

            # argmax over the channel (sublane) axis fused with the bin
            # lookup: bins[k] = 4 + k, first-max tie-break == min over ties.
            bins = (lax.broadcasted_iota(jnp.int32, (C, 1), 0) + 4
                    ).astype(jnp.float32)                # (C, 1), tiny
            maxv = jnp.max(p, axis=0, keepdims=True)     # (1, TS)
            depth = jnp.min(jnp.where(p == maxv, bins, 75.0),
                            axis=0, keepdims=True)       # (1, TS)

            mask = jnp.logical_and(g >= 4.0, g <= 75.0)
            acc_sum[...] += jnp.where(mask, jnp.abs(depth - g), 0.0)
            acc_cnt[...] += jnp.where(mask, 1.0, 0.0)

        if needs_valid:
            # Overshoot blocks of the P-split are clamped in the index_map
            # and must never touch the accumulators.
            @pl.when(p_id * bps + i < n_blocks)
            def _():
                compute()
        else:
            compute()

        @pl.when(i == bps - 1)
        def _():
            sum_ref[...] = jnp.sum(acc_sum[...], keepdims=True)
            cnt_ref[...] = jnp.sum(acc_cnt[...], keepdims=True)

    return kernel


def _make_plain_kernel(TR, P, bps, n_blocks, rows, ragged):
    """Non-71-channel path: prediction already has gt's shape.

    Grid: (P, bps).  Blocks are (TR, W) row blocks of a zero-copy 2-D view.
    Only the last row block can be ragged; its index mask lives in a
    pl.when-gated edge branch so the steady state pays nothing.
    """
    needs_valid = (P * bps != n_blocks)

    def kernel(p_ref, g_ref, sum_ref, cnt_ref, acc_sum, acc_cnt):
        p_id = pl.program_id(0)
        i = pl.program_id(1)
        blk = p_id * bps + i          # logical (unclamped) row-block index

        @pl.when(i == 0)
        def _():
            acc_sum[...] = jnp.zeros_like(acc_sum)
            acc_cnt[...] = jnp.zeros_like(acc_cnt)

        def accum(extra_mask):
            p = p_ref[...].astype(jnp.float32)
            g = g_ref[...].astype(jnp.float32)
            mask = jnp.logical_and(g >= 4.0, g <= 75.0)
            if extra_mask is not None:
                mask = jnp.logical_and(mask, extra_mask)
            acc_sum[...] += jnp.where(mask, jnp.abs(p - g), 0.0)
            acc_cnt[...] += jnp.where(mask, 1.0, 0.0)

        if ragged:
            @pl.when(blk < n_blocks - 1)         # steady state: no index mask
            def _():
                accum(None)

            @pl.when(blk == n_blocks - 1)        # ragged edge block only
            def _():
                row = lax.broadcasted_iota(jnp.int32, (TR, 1), 0)
                accum((blk * TR + row) < rows)
        elif needs_valid:
            @pl.when(blk < n_blocks)             # skip clamped overshoot
            def _():
                accum(None)
        else:
            accum(None)

        @pl.when(i == bps - 1)
        def _():
            sum_ref[...] = jnp.sum(acc_sum[...], keepdims=True)
            cnt_ref[...] = jnp.sum(acc_cnt[...], keepdims=True)

    return kernel


# ---------------------------------------------------------------------------
# Wrappers
# ---------------------------------------------------------------------------
def _bins_path(prediction, gt, lane_block, num_slices, vmem_limit_bytes):
    N, C = int(prediction.shape[0]), int(prediction.shape[1])
    HW = 1
    for d in prediction.shape[2:]:
        HW *= int(d)

    # Zero-copy views: (N, C, H, W) -> (N, C, HW); NO pad of the big tensor.
    p3 = prediction.reshape(N, C, HW)
    g3 = gt.reshape(N, 1, HW)

    TS = max(128, _round_up(min(lane_block, _round_up(HW, 128)), 128))
    n_blocks = _cdiv(HW, TS)
    P = max(1, int(num_slices))
    bps = _cdiv(n_blocks, P)
    last = n_blocks - 1

    # Pad only gt (71x smaller) with zeros out to the lane extent the grid
    # reads; zero gt fails the gt>=4 check, so the ragged tail of the
    # *unpadded* prediction is masked for free (no in-kernel index mask).
    HWg = n_blocks * TS
    if HWg != HW:
        g3 = jnp.pad(g3, ((0, 0), (0, 0), (0, HWg - HW)))

    kernel = _make_bins_kernel(C=C, P=P, bps=bps, n_blocks=n_blocks)

    def in_map(n, p, i):
        # Clamp the P-split overshoot so no block is ever fully out of
        # bounds; those steps are skipped inside the kernel.
        return (n, 0, jnp.minimum(p * bps + i, last))

    sums, cnts = pl.pallas_call(
        kernel,
        out_shape=(jax.ShapeDtypeStruct((N, P, 1, 1), jnp.float32),
                   jax.ShapeDtypeStruct((N, P, 1, 1), jnp.float32)),
        grid_spec=pltpu.PrefetchScalarGridSpec(
            num_scalar_prefetch=0,
            grid=(N, P, bps),
            in_specs=[
                pl.BlockSpec((None, C, TS), in_map),
                pl.BlockSpec((None, 1, TS), in_map),
            ],
            out_specs=(
                pl.BlockSpec((None, None, 1, 1), lambda n, p, i: (n, p, 0, 0)),
                pl.BlockSpec((None, None, 1, 1), lambda n, p, i: (n, p, 0, 0)),
            ),
            scratch_shapes=[
                pltpu.VMEM((1, TS), jnp.float32),
                pltpu.VMEM((1, TS), jnp.float32),
            ],
        ),
        compiler_params=pltpu.CompilerParams(
            dimension_semantics=("parallel", "parallel", "arbitrary"),
            vmem_limit_bytes=vmem_limit_bytes,
        ),
    )(p3, g3)
    # Final masked mean from the per-(image, slice) partials (plain JAX).
    return jnp.sum(sums) / jnp.sum(cnts)


def _plain_path(prediction, gt, row_block, num_slices, vmem_limit_bytes):
    L = int(prediction.size)
    if L % 128 == 0:
        # Free, perfectly lane-dense view.
        p2 = prediction.reshape(-1, 128)
        g2 = gt.reshape(-1, 128)
    else:
        # Free view over the natural trailing dim (no HBM pad copy); the
        # block's lane dim equals the full array dim, which Mosaic allows.
        W_nat = int(prediction.shape[-1]) if prediction.ndim >= 2 else L
        p2 = prediction.reshape(-1, W_nat)
        g2 = gt.reshape(-1, W_nat)
    rows, W = int(p2.shape[0]), int(p2.shape[1])

    # Row block: multiple of 8, capped so one block stays a few MiB.
    elems_cap = 2 * 1024 * 1024                  # ~8 MiB f32 per array/block
    tr_cap = max(8, (elems_cap // max(W, 1)) // 8 * 8)
    TR = max(8, min(_round_up(row_block, 8), tr_cap, _round_up(rows, 8)))

    n_blocks = _cdiv(rows, TR)
    P = max(1, int(num_slices))
    bps = _cdiv(n_blocks, P)
    last = n_blocks - 1
    ragged = (rows % TR) != 0

    kernel = _make_plain_kernel(TR=TR, P=P, bps=bps, n_blocks=n_blocks,
                                rows=rows, ragged=ragged)

    def in_map(p, i):
        return (jnp.minimum(p * bps + i, last), 0)

    sums, cnts = pl.pallas_call(
        kernel,
        out_shape=(jax.ShapeDtypeStruct((P, 1, 1), jnp.float32),
                   jax.ShapeDtypeStruct((P, 1, 1), jnp.float32)),
        grid_spec=pltpu.PrefetchScalarGridSpec(
            num_scalar_prefetch=0,
            grid=(P, bps),
            in_specs=[
                pl.BlockSpec((TR, W), in_map),
                pl.BlockSpec((TR, W), in_map),
            ],
            out_specs=(
                pl.BlockSpec((None, 1, 1), lambda p, i: (p, 0, 0)),
                pl.BlockSpec((None, 1, 1), lambda p, i: (p, 0, 0)),
            ),
            scratch_shapes=[
                pltpu.VMEM((TR, W), jnp.float32),
                pltpu.VMEM((TR, W), jnp.float32),
            ],
        ),
        compiler_params=pltpu.CompilerParams(
            dimension_semantics=("parallel", "arbitrary"),
            vmem_limit_bytes=vmem_limit_bytes,
        ),
    )(p2, g2)
    return jnp.sum(sums) / jnp.sum(cnts)


def d_mse_loss(prediction, gt, *, lane_block=16384, row_block=2048,
               num_slices=2, vmem_limit_bytes=48 * 1024 * 1024):
    """Pallas implementation of D_MSELoss.forward."""
    if prediction.ndim >= 2 and prediction.shape[1] == 71:
        return _bins_path(prediction, gt, lane_block, num_slices,
                          vmem_limit_bytes)
    return _plain_path(prediction, gt, row_block, num_slices,
                       vmem_limit_bytes)


# ---------------------------------------------------------------------------
# Pure-JAX reference (for correctness check)
# ---------------------------------------------------------------------------
def d_mse_loss_ref(prediction, gt):
    if prediction.ndim >= 2 and prediction.shape[1] == 71:
        depth_bins = jnp.linspace(4.0, 74.0, 71, dtype=jnp.float32)
        idx = jnp.argmax(prediction, axis=1)
        prediction = depth_bins[idx]
    err = prediction.astype(jnp.float32) - gt.astype(jnp.float32)
    mask = jnp.logical_and(gt >= 4, gt <= 75)
    abs_err = jnp.where(mask, jnp.abs(err), 0.0)
    return jnp.sum(abs_err) / jnp.sum(mask.astype(jnp.float32))


# ---------------------------------------------------------------------------
if __name__ == "__main__":
    key = jax.random.PRNGKey(0)
    keys = jax.random.split(key, 10)

    def _check(out, ref):
        out = jax.block_until_ready(out)
        ref = jax.block_until_ready(ref)
        assert jnp.allclose(out, ref, rtol=1e-5, atol=1e-5), (out, ref)

    # 1) 71-bin path: per-pixel logits over 71 depth bins (NCHW), small shape.
    N, C, H, W = 2, 71, 16, 16
    pred = jax.random.normal(keys[0], (N, C, H, W), dtype=jnp.float32)
    gt = jax.random.uniform(keys[1], (N, H, W), dtype=jnp.float32,
                            minval=0.0, maxval=80.0)
    _check(d_mse_loss(pred, gt), d_mse_loss_ref(pred, gt))

    # 2) bins path, multi-block lane grid + ragged edge block (HW=384, TS=256).
    pred2 = jax.random.normal(keys[2], (N, C, 16, 24), dtype=jnp.float32)
    gt2 = jax.random.uniform(keys[3], (N, 16, 24), dtype=jnp.float32,
                             minval=0.0, maxval=80.0)
    _check(d_mse_loss(pred2, gt2, lane_block=256), d_mse_loss_ref(pred2, gt2))

    # 3) bins path, HW not a multiple of 128 (prediction left unpadded).
    pred3 = jax.random.normal(keys[4], (1, C, 13, 13), dtype=jnp.float32)
    gt3 = jax.random.uniform(keys[5], (1, 13, 13), dtype=jnp.float32,
                             minval=0.0, maxval=80.0)
    _check(d_mse_loss(pred3, gt3), d_mse_loss_ref(pred3, gt3))

    # 4) plain path (prediction already a depth map).
    pred_p = jax.random.uniform(keys[6], (N, H, W), dtype=jnp.float32,
                                minval=0.0, maxval=80.0)
    _check(d_mse_loss(pred_p, gt), d_mse_loss_ref(pred_p, gt))

    # 5) plain path, multi-block grid with a ragged last row block.
    pred_p2 = jax.random.uniform(keys[7], (4, 16, 40), dtype=jnp.float32,
                                 minval=0.0, maxval=80.0)
    gt_p2 = jax.random.uniform(keys[8], (4, 16, 40), dtype=jnp.float32,
                               minval=0.0, maxval=80.0)
    _check(d_mse_loss(pred_p2, gt_p2, row_block=8),
           d_mse_loss_ref(pred_p2, gt_p2))

    # 6) plain path, element count not a multiple of 128 (natural 2-D view).
    pred_p3 = jax.random.uniform(keys[9], (3, 10, 11), dtype=jnp.float32,
                                 minval=0.0, maxval=80.0)
    gt_p3 = jax.random.uniform(keys[0], (3, 10, 11), dtype=jnp.float32,
                               minval=0.0, maxval=80.0)
    _check(d_mse_loss(pred_p3, gt_p3), d_mse_loss_ref(pred_p3, gt_p3))

    print("KERNEL_OK")
</pallas_src>

<mosaic_0001>
module attributes {stable_mosaic.version = 11 : i64} {
  func.func @kernel(%arg0: i32, %arg1: i32, %arg2: i32, %arg3: memref<1x71x256xf32, #tpu.memory_space<vmem>>, %arg4: memref<1x1x256xf32, #tpu.memory_space<vmem>>, %arg5: memref<1x1x1x1xf32, #tpu.memory_space<vmem>>, %arg6: memref<1x1x1x1xf32, #tpu.memory_space<vmem>>, %arg7: memref<1x256xf32, #tpu.memory_space<vmem>>, %arg8: memref<1x256xf32, #tpu.memory_space<vmem>>) attributes {dimension_semantics = [#tpu.dimension_semantics<parallel>, #tpu.dimension_semantics<parallel>, #tpu.dimension_semantics<arbitrary>], iteration_bounds = array<i64: 2, 2, 1>, scalar_prefetch = 0 : i64, scratch_operands = 2 : i64, tpu.core_type = #tpu.core_type<tc>, window_params = [{transform_indices = @transform_0, window_bounds = array<i64: 1, 71, 256>}, {transform_indices = @transform_1, window_bounds = array<i64: 1, 1, 256>}, {transform_indices = @transform_2, window_bounds = array<i64: 1, 1, 1, 1>}, {transform_indices = @transform_3, window_bounds = array<i64: 1, 1, 1, 1>}]} {
    %c0_i32 = arith.constant 0 : i32
    %0 = arith.cmpi eq, %arg2, %c0_i32 : i32
    %1 = arith.extui %0 : i1 to i32
    %c0_i32_0 = arith.constant 0 : i32
    %2 = arith.cmpi ne, %1, %c0_i32_0 : i32
    scf.if %2 {
      %cst = arith.constant 0.000000e+00 : f32
      %11 = vector.broadcast %cst : f32 to vector<1x256xf32>
      %c0 = arith.constant 0 : index
      %c0_5 = arith.constant 0 : index
      %12 = vector.load %arg7[%c0, %c0_5] : memref<1x256xf32, #tpu.memory_space<vmem>>, vector<1x256xf32>
      tpu.vector_store %arg7[%c0, %c0_5], %11 {strides = array<i32>} : memref<1x256xf32, #tpu.memory_space<vmem>>, vector<1x256xf32>,
      %cst_6 = arith.constant 0.000000e+00 : f32
      %13 = vector.broadcast %cst_6 : f32 to vector<1x256xf32>
      %c0_7 = arith.constant 0 : index
      %c0_8 = arith.constant 0 : index
      %14 = vector.load %arg8[%c0_7, %c0_8] : memref<1x256xf32, #tpu.memory_space<vmem>>, vector<1x256xf32>
      tpu.vector_store %arg8[%c0_7, %c0_8], %13 {strides = array<i32>} : memref<1x256xf32, #tpu.memory_space<vmem>>, vector<1x256xf32>,
    } else {
    }
    %c1_i32 = arith.constant 1 : i32
    %3 = arith.muli %arg1, %c1_i32 : i32
    %4 = arith.addi %3, %arg2 : i32
    %c1_i32_1 = arith.constant 1 : i32
    %5 = arith.cmpi slt, %4, %c1_i32_1 : i32
    %6 = arith.extui %5 : i1 to i32
    %c0_i32_2 = arith.constant 0 : i32
    %7 = arith.cmpi ne, %6, %c0_i32_2 : i32
    scf.if %7 {
      %c0 = arith.constant 0 : index
      %c0_5 = arith.constant 0 : index
      %c0_6 = arith.constant 0 : index
      %11 = vector.load %arg3[%c0, %c0_5, %c0_6] : memref<1x71x256xf32, #tpu.memory_space<vmem>>, vector<1x71x256xf32>
      %12 = vector.shape_cast %11 : vector<1x71x256xf32> to vector<71x256xf32>
      %c0_7 = arith.constant 0 : index
      %c0_8 = arith.constant 0 : index
      %c0_9 = arith.constant 0 : index
      %13 = vector.load %arg4[%c0_7, %c0_8, %c0_9] : memref<1x1x256xf32, #tpu.memory_space<vmem>>, vector<1x1x256xf32>
      %14 = vector.shape_cast %13 : vector<1x1x256xf32> to vector<1x256xf32>
      %15 = tpu.iota {dimensions = array<i32: 0>} : vector<71x1xi32>
      %c4_i32 = arith.constant 4 : i32
      %16 = vector.broadcast %c4_i32 : i32 to vector<71x1xi32>
      %17 = arith.addi %15, %16 : vector<71x1xi32>
      %18 = arith.sitofp %17 : vector<71x1xi32> to vector<71x1xf32>
      %cst = arith.constant dense<0xFF800000> : vector<256xf32>
      %19 = vector.multi_reduction <maximumf>, %12, %cst [0] : vector<71x256xf32> to vector<256xf32>
      %20 = vector.shape_cast %19 : vector<256xf32> to vector<1x256xf32>
      %21 = vector.broadcast %20 : vector<1x256xf32> to vector<71x256xf32>
      %22 = arith.cmpf oeq, %12, %21 : vector<71x256xf32>
      %cst_10 = arith.constant 7.500000e+01 : f32
      %23 = vector.shape_cast %18 : vector<71x1xf32> to vector<71x1xf32>
      %24 = vector.broadcast %23 : vector<71x1xf32> to vector<71x256xf32>
      %25 = vector.broadcast %cst_10 : f32 to vector<71x256xf32>
      %26 = arith.select %22, %24, %25 : vector<71x256xi1>, vector<71x256xf32>
      %cst_11 = arith.constant dense<0x7F800000> : vector<256xf32>
      %27 = vector.multi_reduction <minimumf>, %26, %cst_11 [0] : vector<71x256xf32> to vector<256xf32>
      %28 = vector.shape_cast %27 : vector<256xf32> to vector<1x256xf32>
      %cst_12 = arith.constant 4.000000e+00 : f32
      %29 = vector.broadcast %cst_12 : f32 to vector<1x256xf32>
      %30 = arith.cmpf oge, %14, %29 : vector<1x256xf32>
      %cst_13 = arith.constant 7.500000e+01 : f32
      %31 = vector.broadcast %cst_13 : f32 to vector<1x256xf32>
      %32 = arith.cmpf ole, %14, %31 : vector<1x256xf32>
      %33 = arith.andi %30, %32 : vector<1x256xi1>
      %c0_14 = arith.constant 0 : index
      %c0_15 = arith.constant 0 : index
      %34 = vector.load %arg7[%c0_14, %c0_15] : memref<1x256xf32, #tpu.memory_space<vmem>>, vector<1x256xf32>
      %35 = arith.subf %28, %14 : vector<1x256xf32>
      %36 = math.absf %35 : vector<1x256xf32>
      %cst_16 = arith.constant 0.000000e+00 : f32
      %37 = vector.broadcast %cst_16 : f32 to vector<1x256xf32>
      %38 = arith.select %33, %36, %37 : vector<1x256xi1>, vector<1x256xf32>
      %39 = arith.addf %34, %38 : vector<1x256xf32>
      %c0_17 = arith.constant 0 : index
      %c0_18 = arith.constant 0 : index
      %40 = vector.load %arg7[%c0_17, %c0_18] : memref<1x256xf32, #tpu.memory_space<vmem>>, vector<1x256xf32>
      tpu.vector_store %arg7[%c0_17, %c0_18], %39 {strides = array<i32>} : memref<1x256xf32, #tpu.memory_space<vmem>>, vector<1x256xf32>,
      %c0_19 = arith.constant 0 : index
      %c0_20 = arith.constant 0 : index
      %41 = vector.load %arg8[%c0_19, %c0_20] : memref<1x256xf32, #tpu.memory_space<vmem>>, vector<1x256xf32>
      %cst_21 = arith.constant 1.000000e+00 : f32
      %cst_22 = arith.constant 0.000000e+00 : f32
      %42 = vector.broadcast %cst_21 : f32 to vector<1x256xf32>
      %43 = vector.broadcast %cst_22 : f32 to vector<1x256xf32>
      %44 = arith.select %33, %42, %43 : vector<1x256xi1>, vector<1x256xf32>
      %45 = arith.addf %41, %44 : vector<1x256xf32>
      %c0_23 = arith.constant 0 : index
      %c0_24 = arith.constant 0 : index
      %46 = vector.load %arg8[%c0_23, %c0_24] : memref<1x256xf32, #tpu.memory_space<vmem>>, vector<1x256xf32>
      tpu.vector_store %arg8[%c0_23, %c0_24], %45 {strides = array<i32>} : memref<1x256xf32, #tpu.memory_space<vmem>>, vector<1x256xf32>,
    } else {
    }
    %c0_i32_3 = arith.constant 0 : i32
    %8 = arith.cmpi eq, %arg2, %c0_i32_3 : i32
    %9 = arith.extui %8 : i1 to i32
    %c0_i32_4 = arith.constant 0 : i32
    %10 = arith.cmpi ne, %9, %c0_i32_4 : i32
    scf.if %10 {
      %c0 = arith.constant 0 : index
      %c0_5 = arith.constant 0 : index
      %11 = vector.load %arg7[%c0, %c0_5] : memref<1x256xf32, #tpu.memory_space<vmem>>, vector<1x256xf32>
      %12 = vector.shape_cast %11 : vector<1x256xf32> to vector<1x1x256xf32>
      %cst = arith.constant dense<0.000000e+00> : vector<1xf32>
      %13 = vector.multi_reduction <add>, %12, %cst [1, 2] : vector<1x1x256xf32> to vector<1xf32>
      %14 = vector.shape_cast %13 : vector<1xf32> to vector<1x1x1xf32>
      %15 = vector.extract %14[0, 0, 0] : f32 from vector<1x1x1xf32>
      %16 = vector.broadcast %15 : f32 to vector<1x1xf32>
      %c0_6 = arith.constant 0 : index
      %c0_7 = arith.constant 0 : index
      %c0_8 = arith.constant 0 : index
      %c0_9 = arith.constant 0 : index
      %17 = vector.load %arg5[%c0_6, %c0_7, %c0_8, %c0_9] : memref<1x1x1x1xf32, #tpu.memory_space<vmem>>, vector<1x1x1x1xf32>
      %18 = vector.shape_cast %17 : vector<1x1x1x1xf32> to vector<1x1xf32>
      %19 = vector.shape_cast %16 : vector<1x1xf32> to vector<1x1x1x1xf32>
      tpu.vector_store %arg5[%c0_6, %c0_7, %c0_8, %c0_9], %19 {strides = array<i32>} : memref<1x1x1x1xf32, #tpu.memory_space<vmem>>, vector<1x1x1x1xf32>,
      %c0_10 = arith.constant 0 : index
      %c0_11 = arith.constant 0 : index
      %20 = vector.load %arg8[%c0_10, %c0_11] : memref<1x256xf32, #tpu.memory_space<vmem>>, vector<1x256xf32>
      %21 = vector.shape_cast %20 : vector<1x256xf32> to vector<1x1x256xf32>
      %cst_12 = arith.constant dense<0.000000e+00> : vector<1xf32>
      %22 = vector.multi_reduction <add>, %21, %cst_12 [1, 2] : vector<1x1x256xf32> to vector<1xf32>
      %23 = vector.shape_cast %22 : vector<1xf32> to vector<1x1x1xf32>
      %24 = vector.extract %23[0, 0, 0] : f32 from vector<1x1x1xf32>
      %25 = vector.broadcast %24 : f32 to vector<1x1xf32>
      %c0_13 = arith.constant 0 : index
      %c0_14 = arith.constant 0 : index
      %c0_15 = arith.constant 0 : index
      %c0_16 = arith.constant 0 : index
      %26 = vector.load %arg6[%c0_13, %c0_14, %c0_15, %c0_16] : memref<1x1x1x1xf32, #tpu.memory_space<vmem>>, vector<1x1x1x1xf32>
      %27 = vector.shape_cast %26 : vector<1x1x1x1xf32> to vector<1x1xf32>
      %28 = vector.shape_cast %25 : vector<1x1xf32> to vector<1x1x1x1xf32>
      tpu.vector_store %arg6[%c0_13, %c0_14, %c0_15, %c0_16], %28 {strides = array<i32>} : memref<1x1x1x1xf32, #tpu.memory_space<vmem>>, vector<1x1x1x1xf32>,
    } else {
    }
    return
  }
  func.func @transform_0(%arg0: i32, %arg1: i32, %arg2: i32) -> (i32, i32, i32) {
    %c1_i32 = arith.constant 1 : i32
    %0 = arith.muli %arg1, %c1_i32 : i32
    %1 = arith.addi %0, %arg2 : i32
    %c0_i32 = arith.constant 0 : i32
    %2 = arith.minsi %1, %c0_i32 : i32
    %c0_i32_0 = arith.constant 0 : i32
    %c0_i32_1 = arith.constant 0 : i32
    return %arg0, %c0_i32_0, %2 : i32, i32, i32
  }
  func.func @transform_1(%arg0: i32, %arg1: i32, %arg2: i32) -> (i32, i32, i32) {
    %c1_i32 = arith.constant 1 : i32
    %0 = arith.muli %arg1, %c1_i32 : i32
    %1 = arith.addi %0, %arg2 : i32
    %c0_i32 = arith.constant 0 : i32
    %2 = arith.minsi %1, %c0_i32 : i32
    %c0_i32_0 = arith.constant 0 : i32
    %c0_i32_1 = arith.constant 0 : i32
    return %arg0, %c0_i32_0, %2 : i32, i32, i32
  }
  func.func @transform_2(%arg0: i32, %arg1: i32, %arg2: i32) -> (i32, i32, i32, i32) {
    %c0_i32 = arith.constant 0 : i32
    %c0_i32_0 = arith.constant 0 : i32
    %c0_i32_1 = arith.constant 0 : i32
    return %arg0, %arg1, %c0_i32, %c0_i32_0 : i32, i32, i32, i32
  }
  func.func @transform_3(%arg0: i32, %arg1: i32, %arg2: i32) -> (i32, i32, i32, i32) {
    %c0_i32 = arith.constant 0 : i32
    %c0_i32_0 = arith.constant 0 : i32
    %c0_i32_1 = arith.constant 0 : i32
    return %arg0, %arg1, %c0_i32, %c0_i32_0 : i32, i32, i32, i32
  }
}

</mosaic_0001>

<llo_original>
// kernel: tpu_custom_call.1
$region0: #{tpu_custom_call.1}
  #allocation0 [shape = 'u32[]', space=smem, size = 0x4, offset = 0x4, fixed_abs, tag = 'smem constant byte address 0x4 - core index']
  #allocation1 [shape = 'u32[144,128]{1,0:T(1,128)}', space=vmem, size = 0x12000, scoped, tag = 'internal scratch']
  #allocation2 [shape = 'f32[1,256]{1,0:T(1,128)}', space=vmem, size = 0x400, scoped, tag = 'scratch operand']
  #allocation3 [shape = 'f32[1,256]{1,0:T(1,128)}', space=vmem, size = 0x400, scoped, tag = 'scratch operand']
  %s0 = inlined_call_operand.vmem [shape: f32[2,71,256], index: 0, kind: input, shape index: {}]
  %s1 = inlined_call_operand.vmem [shape: f32[2,1,256], index: 1, kind: input, shape index: {}]
  %s2 = inlined_call_operand.vmem [shape: f32[2,2,1,1], index: 2, kind: output, shape index: {0}]
  %s3 = inlined_call_operand.vmem [shape: f32[2,2,1,1], index: 3, kind: output, shape index: {1}]
  %4 = xla_tuple %s2, %s3
  %s5 = sld [smem:[#allocation0]]
  $region61: #{tpu_custom_call.1} parent=0
    _
  %s7 = ssub.s32 1, %s5
  %s8 = scalar_select 0, %s7, %s5
  loop: start=0, step=1, limit=6
  $region2: #{tpu_custom_call.1} parent=0 // loop_pre_header
    _
  $region3: #{tpu_custom_call.1} parent=0 // loop_header
    %s10 = sphi 0, %s14
    %p11 = scmp.ge.s32.totalorder %s10, 6
    %s17 = sphi 0, %s36
    %s18 = sphi 0, %s32
    %s19 = sphi 0, %s28
    %s20 = sphi 0, %s17
    %s21 = sphi 0, %s18
    %s22 = sphi 0, %s19
    %s23 = sphi 0, %s20
    %s24 = sphi 0, %s21
    %s25 = sphi 0, %s22
    %s47 = sphi 0, %s49
    %s50 = sphi 0, %s47
    %s51 = sphi 0, %s50
    %s67 = sphi 0, %s51
    %s81 = sphi 0, %s83
    %s84 = sphi 0, %s81
    %s85 = sphi 0, %s84
    %s101 = sphi 0, %s85
    %s109 = sphi 0, %s111
    %s112 = sphi 0, %s109
    %s113 = sphi 0, %s112
    %s129 = sphi 0, %s113
    %s137 = sphi 0, %s139
    %s140 = sphi 0, %s137
    %s141 = sphi 0, %s140
    %s157 = sphi 0, %s141
  $region4: #{tpu_custom_call.1} parent=0 // loop_header_branch
    %13 = sbr.rel (%p11) target = $region8
  $region5: #{tpu_custom_call.1} parent=0 // loop_body
    %s15 = ssub.s32 %s10, 1
    %s16 = ssub.s32 %s10, 2
    %s26 = sadd.s32 1, %s19
    %p27 = scmp.ge.s32.totalorder %s26, 1
    %s28 = scalar_select %p27, 0, %s26
    %s29 = sadd.s32 1, %s18
    %s30 = scalar_select %p27, %s29, %s18
    %p31 = scmp.ge.s32.totalorder %s30, 2
    %s32 = scalar_select %p31, 0, %s30
    %s33 = sadd.s32 1, %s17
    %s34 = scalar_select %p31, %s33, %s17
    %p35 = scmp.ge.s32.totalorder %s34, 2
    %s36 = scalar_select %p35, 0, %s34
    %s37 = sadd.s32 %s18, %s19
    %p38 = scmp.lt.s32.totalorder %s37, 0
    %s39 = scalar_select %p38, %s37, 0
    %s40 = sadd.s32 %s32, %s28
    %p41 = scmp.lt.s32.totalorder %s40, 0
    %s42 = scalar_select %p41, %s40, 0
    %s43 = ssub.s32 %s17, %s36
    %s44 = ssub.s32 %s39, %s42
    %s45 = sor.u32 %s43, %s44
    %p46 = scmp.eq.s32.totalorder %s45, 0
    %s48 = sadd.s32 %s47, 1
    %s49 = scalar_select %p46, %s47, %s48
    %p52 = pneg %p46
    %p53 = scmp.eq.s32.totalorder %s10, 3
    %p54 = por %p52, %p53
    %p55 = scmp.ne.s32.totalorder %s47, %s50
    %p56 = scmp.eq.s32.totalorder %s10, 0
    %p57 = por %p55, %p56
    %p58 = scmp.ne.s32.totalorder %s47, %s50
    %p59 = scmp.eq.s32.totalorder %s15, 3
    %p60 = por %p58, %p59
    %p61 = scmp.ne.s32.totalorder %s50, %s51
    %p62 = scmp.eq.s32.totalorder %s15, 0
    %p63 = por %p61, %p62
    %p64 = scmp.ne.s32.totalorder %s50, %s51
    %p65 = scmp.eq.s32.totalorder %s16, 3
    %p66 = por %p64, %p65
    %p68 = scmp.ne.s32.totalorder %s51, %s67
    %p69 = scmp.eq.s32.totalorder %s16, 0
    %p70 = por %p68, %p69
    %s71 = sadd.s32 %s18, %s19
    %p72 = scmp.lt.s32.totalorder %s71, 0
    %s73 = scalar_select %p72, %s71, 0
    %s74 = sadd.s32 %s32, %s28
    %p75 = scmp.lt.s32.totalorder %s74, 0
    %s76 = scalar_select %p75, %s74, 0
    %s77 = ssub.s32 %s17, %s36
    %s78 = ssub.s32 %s73, %s76
    %s79 = sor.u32 %s77, %s78
    %p80 = scmp.eq.s32.totalorder %s79, 0
    %s82 = sadd.s32 %s81, 1
    %s83 = scalar_select %p80, %s81, %s82
    %p86 = pneg %p80
    %p87 = scmp.eq.s32.totalorder %s10, 3
    %p88 = por %p86, %p87
    %p89 = scmp.ne.s32.totalorder %s81, %s84
    %p90 = scmp.eq.s32.totalorder %s10, 0
    %p91 = por %p89, %p90
    %p92 = scmp.ne.s32.totalorder %s81, %s84
    %p93 = scmp.eq.s32.totalorder %s15, 3
    %p94 = por %p92, %p93
    %p95 = scmp.ne.s32.totalorder %s84, %s85
    %p96 = scmp.eq.s32.totalorder %s15, 0
    %p97 = por %p95, %p96
    %p98 = scmp.ne.s32.totalorder %s84, %s85
    %p99 = scmp.eq.s32.totalorder %s16, 3
    %p100 = por %p98, %p99
    %p102 = scmp.ne.s32.totalorder %s85, %s101
    %p103 = scmp.eq.s32.totalorder %s16, 0
    %p104 = por %p102, %p103
    %s105 = ssub.s32 %s17, %s36
    %s106 = ssub.s32 %s18, %s32
    %s107 = sor.u32 %s105, %s106
    %p108 = scmp.eq.s32.totalorder %s107, 0
    %s110 = sadd.s32 %s109, 1
    %s111 = scalar_select %p108, %s109, %s110
    %p114 = pneg %p108
    %p115 = scmp.eq.s32.totalorder %s10, 3
    %p116 = por %p114, %p115
    %p117 = scmp.ne.s32.totalorder %s109, %s112
    %p118 = scmp.eq.s32.totalorder %s10, 0
    %p119 = por %p117, %p118
    %p120 = scmp.ne.s32.totalorder %s109, %s112
    %p121 = scmp.eq.s32.totalorder %s15, 3
    %p122 = por %p120, %p121
    %p123 = scmp.ne.s32.totalorder %s112, %s113
    %p124 = scmp.eq.s32.totalorder %s15, 0
    %p125 = por %p123, %p124
    %p126 = scmp.ne.s32.totalorder %s112, %s113
    %p127 = scmp.eq.s32.totalorder %s16, 3
    %p128 = por %p126, %p127
    %p130 = scmp.ne.s32.totalorder %s113, %s129
    %p131 = scmp.eq.s32.totalorder %s16, 0
    %p132 = por %p130, %p131
    %s133 = ssub.s32 %s17, %s36
    %s134 = ssub.s32 %s18, %s32
    %s135 = sor.u32 %s133, %s134
    %p136 = scmp.eq.s32.totalorder %s135, 0
    %s138 = sadd.s32 %s137, 1
    %s139 = scalar_select %p136, %s137, %s138
    %p142 = pneg %p136
    %p143 = scmp.eq.s32.totalorder %s10, 3
    %p144 = por %p142, %p143
    %p145 = scmp.ne.s32.totalorder %s137, %s140
    %p146 = scmp.eq.s32.totalorder %s10, 0
    %p147 = por %p145, %p146
    %p148 = scmp.ne.s32.totalorder %s137, %s140
    %p149 = scmp.eq.s32.totalorder %s15, 3
    %p150 = por %p148, %p149
    %p151 = scmp.ne.s32.totalorder %s140, %s141
    %p152 = scmp.eq.s32.totalorder %s15, 0
    %p153 = por %p151, %p152
    %p154 = scmp.ne.s32.totalorder %s140, %s141
    %p155 = scmp.eq.s32.totalorder %s16, 3
    %p156 = por %p154, %p155
    %p158 = scmp.ne.s32.totalorder %s141, %s157
    %p159 = scmp.eq.s32.totalorder %s16, 0
    %p160 = por %p158, %p159
    %p161 = scmp.le.s32.totalorder 1, %s10
    %p162 = scmp.lt.s32.totalorder %s10, 5
    %p163 = pnand %p161, %p162
    %p164 = pneg %p163
    // Predicated region
    $region9: #{tpu_custom_call.1} parent=5 // pred_check
      _
    $region10: #{tpu_custom_call.1} parent=5 // pred_check_branch
      %166 = sbr.rel (%p163) target = $region12
    $region11: #{tpu_custom_call.1} parent=5 // pred_region
      %s167 = ssub.s32 %s10, 1
    $region12: #{tpu_custom_call.1} parent=5 // pred_fallthru
      _
    %p168 = scmp.lt.s32.totalorder %s10, 4
    // Predicated region
    $region13: #{tpu_custom_call.1} parent=5 // pred_check
      %p169 = pneg %p168
    $region14: #{tpu_custom_call.1} parent=5 // pred_check_branch
      %171 = sbr.rel (%p169) target = $region16
    $region15: #{tpu_custom_call.1} parent=5 // pred_region
      // Predicated region
      $region17: #{tpu_custom_call.1} parent=15 // pred_check
        %p172 = pneg %p57
      $region18: #{tpu_custom_call.1} parent=15 // pred_check_branch
        %174 = sbr.rel (%p172) target = $region20
      $region19: #{tpu_custom_call.1} parent=15 // pred_region
        %s175 = sadd.s32 %s18, %s19
        %p176 = scmp.lt.s32.totalorder %s175, 0
        %s177 = scalar_select %p176, %s175, 0
        %s178 = smul.u32 2, %s177
        %p179 = scmp.lt.s32.totalorder %s17, 1
        %s180 = scalar_select %p179, %s17, 1
        %p181 = scmp.lt.s32.totalorder %s178, 1
        %s182 = scalar_select %p181, %s178, 1
        %s183 = smul.addr %s180, 18
        %s184 = sadd.s32 %s182, %s183
        %s185 = smul.addr %s184, 8
        %s186 = scalar_lea.vmem %s0, %s185
        %s187 = sadd.s32 %s18, %s19
        %p188 = scmp.lt.s32.totalorder %s187, 0
        %s189 = scalar_select %p188, %s187, 0
        %s190 = smul.u32 2, %s189
      $region20: #{tpu_custom_call.1} parent=15 // pred_fallthru
        _
      // Predicated region
      $region21: #{tpu_custom_call.1} parent=15 // pred_check
        %p191 = pneg %p91
      $region22: #{tpu_custom_call.1} parent=15 // pred_check_branch
        %193 = sbr.rel (%p191) target = $region24
      $region23: #{tpu_custom_call.1} parent=15 // pred_region
        %s194 = sadd.s32 %s18, %s19
        %p195 = scmp.lt.s32.totalorder %s194, 0
        %s196 = scalar_select %p195, %s194, 0
        %s197 = smul.u32 2, %s196
        %p198 = scmp.lt.s32.totalorder %s17, 1
        %s199 = scalar_select %p198, %s17, 1
        %p200 = scmp.lt.s32.totalorder %s197, 1
        %s201 = scalar_select %p200, %s197, 1
        %s202 = smul.addr %s199, 2
        %s203 = sadd.s32 %s201, %s202
        %s204 = scalar_lea.vmem %s1, %s203
        %s205 = sadd.s32 %s18, %s19
        %p206 = scmp.lt.s32.totalorder %s205, 0
        %s207 = scalar_select %p206, %s205, 0
        %s208 = smul.u32 2, %s207
      $region24: #{tpu_custom_call.1} parent=15 // pred_fallthru
        _
    $region16: #{tpu_custom_call.1} parent=5 // pred_fallthru
      _
    %p209 = scmp.le.s32.totalorder 1, %s10
    %p210 = scmp.lt.s32.totalorder %s10, 5
    %p211 = pnand %p209, %p210
    %p212 = pneg %p211
    // Predicated region
    $region25: #{tpu_custom_call.1} parent=5 // pred_check
      _
    $region26: #{tpu_custom_call.1} parent=5 // pred_check_branch
      %214 = sbr.rel (%p211) target = $region28
    $region27: #{tpu_custom_call.1} parent=5 // pred_region
      %s215 = ssub.s32 %s10, 1
      %s216 = sadd.s32 %s21, %s22
      %p217 = scmp.lt.s32.totalorder %s216, 0
      %s218 = scalar_select %p217, %s216, 0
      %s219 = smul.u32 2, %s218
      %p220 = scmp.lt.s32.totalorder %s20, 1
      %s221 = scalar_select %p220, %s20, 1
      %p222 = scmp.lt.s32.totalorder %s219, 1
      %s223 = scalar_select %p222, %s219, 1
      %s224 = smul.addr %s221, 18
      %s225 = sadd.s32 %s223, %s224
      %s226 = smul.addr %s225, 8
      %s227 = scalar_lea.vmem %s0, %s226
      %p228 = pneg %p63
      %p229 = pneg %p60
      %s230 = sadd.s32 %s21, %s22
      %p231 = scmp.lt.s32.totalorder %s230, 0
      %s232 = scalar_select %p231, %s230, 0
      %s233 = smul.u32 2, %s232
      %p234 = scmp.lt.s32.totalorder %s20, 1
      %s235 = scalar_select %p234, %s20, 1
      %p236 = scmp.lt.s32.totalorder %s233, 1
      %s237 = scalar_select %p236, %s233, 1
      %s238 = smul.addr %s235, 2
      %s239 = sadd.s32 %s237, %s238
      %s240 = scalar_lea.vmem %s1, %s239
      %p241 = pneg %p97
      %p242 = pneg %p94
      %p243 = pneg %p125
      %p244 = pneg %p122
      %p245 = scmp.lt.s32.totalorder %s20, 1
      %s246 = scalar_select %p245, %s20, 1
      %p247 = scmp.lt.s32.totalorder %s21, 1
      %s248 = scalar_select %p247, %s21, 1
      %s249 = smul.addr %s246, 2
      %s250 = sadd.s32 %s248, %s249
      %s251 = scalar_lea.vmem %s2, %s250
      %p252 = pneg %p153
      %p253 = pneg %p150
      %p254 = scmp.lt.s32.totalorder %s20, 1
      %s255 = scalar_select %p254, %s20, 1
      %p256 = scmp.lt.s32.totalorder %s21, 1
      %s257 = scalar_select %p256, %s21, 1
      %s258 = smul.addr %s255, 2
      %s259 = sadd.s32 %s257, %s258
      %s260 = scalar_lea.vmem %s3, %s259
      %s261 = sadd.s32 %s21, %s22
      %p262 = scmp.lt.s32.totalorder %s261, 0
      %s263 = scalar_select %p262, %s261, 0
      %s264 = smul.u32 2, %s263
      %p265 = scmp.lt.s32.totalorder %s20, 1
      %s266 = scalar_select %p265, %s20, 1
      %p267 = scmp.lt.s32.totalorder %s264, 1
      %s268 = scalar_select %p267, %s264, 1
      %s269 = smul.addr %s266, 18
      %s270 = sadd.s32 %s268, %s269
      %s271 = smul.addr %s270, 8
      %s272 = scalar_lea.vmem %s0, %s271
      %s273 = sadd.s32 %s21, %s22
      %p274 = scmp.lt.s32.totalorder %s273, 0
      %s275 = scalar_select %p274, %s273, 0
      %s276 = smul.u32 2, %s275
      %s277 = sadd.s32 %s21, %s22
      %p278 = scmp.lt.s32.totalorder %s277, 0
      %s279 = scalar_select %p278, %s277, 0
      %s280 = smul.u32 2, %s279
      %p281 = scmp.lt.s32.totalorder %s20, 1
      %s282 = scalar_select %p281, %s20, 1
      %p283 = scmp.lt.s32.totalorder %s280, 1
      %s284 = scalar_select %p283, %s280, 1
      %s285 = smul.addr %s282, 2
      %s286 = sadd.s32 %s284, %s285
      %s287 = scalar_lea.vmem %s1, %s286
      %s288 = sadd.s32 %s21, %s22
      %p289 = scmp.lt.s32.totalorder %s288, 0
      %s290 = scalar_select %p289, %s288, 0
      %s291 = smul.u32 2, %s290
      %p292 = scmp.lt.s32.totalorder %s20, 1
      %s293 = scalar_select %p292, %s20, 1
      %p294 = scmp.lt.s32.totalorder %s21, 1
      %s295 = scalar_select %p294, %s21, 1
      %s296 = smul.addr %s293, 2
      %s297 = sadd.s32 %s295, %s296
      %s298 = scalar_lea.vmem %s2, %s297
      %p299 = scmp.lt.s32.totalorder %s20, 1
      %s300 = scalar_select %p299, %s20, 1
      %p301 = scmp.lt.s32.totalorder %s21, 1
      %s302 = scalar_select %p301, %s21, 1
      %s303 = smul.addr %s300, 2
      %s304 = sadd.s32 %s302, %s303
      %s305 = scalar_lea.vmem %s3, %s304
      %p306 = scmp.eq.s32.totalorder %s22, 0
      // Predicated region
      $region29: #{tpu_custom_call.1} parent=27 // pred_check
        %p307 = pneg %p306
      $region30: #{tpu_custom_call.1} parent=27 // pred_check_branch
        %309 = sbr.rel (%p307) target = $region32
      $region31: #{tpu_custom_call.1} parent=27 // pred_region
        %v310 = vlaneseq
        %vm311 = vcmp.ge.s32.totalorder %v310, 0
        %vm312 = vcmp.lt.s32.totalorder %v310, 256
        %vm313 = vmand %vm311, %vm312
        %314 = vst.msk [vmem:[#allocation2] sm:$0x3] %vm313, 0.0
        %315 = vst.msk [vmem:[#allocation3] sm:$0x3] %vm313, 0.0
      $region32: #{tpu_custom_call.1} parent=27 // pred_fallthru
        _
      %s316 = sadd.s32 %s21, %s22
      %p317 = scmp.lt.s32.totalorder %s316, 1
      // Predicated region
      $region33: #{tpu_custom_call.1} parent=27 // pred_check
        %p318 = pneg %p317
      $region34: #{tpu_custom_call.1} parent=27 // pred_check_branch
        %320 = sbr.rel (%p318) target = $region36
      $region35: #{tpu_custom_call.1} parent=27 // pred_region
        %v321 = vld [vmem:[%s272] sm:$0xff]
        %v322 = vld [vmem:[%s272 + $0x8] sm:$0xff]
        %v323 = vld [vmem:[%s272 + $0x10] sm:$0xff]
        %v324 = vld [vmem:[%s272 + $0x18] sm:$0xff]
        %v325 = vld [vmem:[%s272 + $0x20] sm:$0xff]
        %v326 = vld [vmem:[%s272 + $0x28] sm:$0xff]
        %v327 = vld [vmem:[%s272 + $0x30] sm:$0xff]
        %v328 = vld [vmem:[%s272 + $0x38] sm:$0xff]
        %v329 = vld [vmem:[%s272 + $0x40] sm:$0xff]
        %v330 = vld [vmem:[%s272 + $0x48] sm:$0xff]
        %v331 = vld [vmem:[%s272 + $0x50] sm:$0xff]
        %v332 = vld [vmem:[%s272 + $0x58] sm:$0xff]
        %v333 = vld [vmem:[%s272 + $0x60] sm:$0xff]
        %v334 = vld [vmem:[%s272 + $0x68] sm:$0xff]
        %v335 = vld [vmem:[%s272 + $0x70] sm:$0xff]
        %v336 = vld [vmem:[%s272 + $0x78] sm:$0xff]
        %v337 = vld [vmem:[%s272 + $0x80] sm:$0x7f]
        %v338 = vld [vmem:[%s272 + $0x88] sm:$0x7f]
        %v339 = vld [vmem:[%s287] sm:$0x3]
        %v340 = vlaneseq
        %v341 = vshrl.u32 %v340, 7
        %v342 = vadd.s32 %v341, 8
        %v343 = vadd.s32 %v341, 16
        %v344 = vadd.s32 %v341, 24
        %v345 = vadd.s32 %v341, 32
        %v346 = vadd.s32 %v341, 40
        %v347 = vadd.s32 %v341, 48
        %v348 = vadd.s32 %v341, 56
        %v349 = vadd.s32 %v341, 64
        %v350 = vadd.s32 %v341, 4
        %v351 = vadd.s32 %v342, 4
        %v352 = vadd.s32 %v343, 4
        %v353 = vadd.s32 %v344, 4
        %v354 = vadd.s32 %v345, 4
        %v355 = vadd.s32 %v346, 4
        %v356 = vadd.s32 %v347, 4
        %v357 = vadd.s32 %v348, 4
        %v358 = vadd.s32 %v349, 4
        %v359 = vcvt.s32.f32 %v350
        %v360 = vcvt.s32.f32 %v351
        %v361 = vcvt.s32.f32 %v352
        %v362 = vcvt.s32.f32 %v353
        %v363 = vcvt.s32.f32 %v354
        %v364 = vcvt.s32.f32 %v355
        %v365 = vcvt.s32.f32 %v356
        %v366 = vcvt.s32.f32 %v357
        %v367 = vcvt.s32.f32 %v358
        %v368 = vmax.f32 %v321, %v325
        %v369 = vmax.f32 %v323, %v327
        %v370 = vmax.f32 %v368, %v329
        %v371 = vmax.f32 %v369, %v331
        %v372 = vmax.f32 %v370, %v333
        %v373 = vmax.f32 %v371, %v335
        %vm374 = vcmask 1046528
        %v375 = vsel %vm374, %v337, -inf
        %v376 = vmax.f32 %v372, %v375
        %v377 = vmax.f32 %v376, %v373
        %v378 = vrot.slane %v377, 4
        %v379 = vmax.f32 %v377, %v378
        %v380 = vrot.slane %v379, 2
        %v381 = vmax.f32 %v379, %v380
        %v382 = vrot.slane %v381, 1
        %v383 = vmax.f32 %v381, %v382
        %v384 = vmax.f32 %v322, %v326
        %v385 = vmax.f32 %v324, %v328
        %v386 = vmax.f32 %v384, %v330
        %v387 = vmax.f32 %v385, %v332
        %v388 = vmax.f32 %v386, %v334
        %v389 = vmax.f32 %v387, %v336
        %v390 = vsel %vm374, %v338, -inf
        %v391 = vmax.f32 %v388, %v390
        %v392 = vmax.f32 %v391, %v389
        %v393 = vrot.slane %v392, 4
        %v394 = vmax.f32 %v392, %v393
        %v395 = vrot.slane %v394, 2
        %v396 = vmax.f32 %v394, %v395
        %v397 = vrot.slane %v396, 1
        %v398 = vmax.f32 %v396, %v397
        %vm399 = vcmp.eq.f32.partialorder %v321, %v383
        %vm400 = vcmp.eq.f32.partialorder %v322, %v398
        %vm401 = vcmp.eq.f32.partialorder %v323, %v383
        %vm402 = vcmp.eq.f32.partialorder %v324, %v398
        %vm403 = vcmp.eq.f32.partialorder %v325, %v383
        %vm404 = vcmp.eq.f32.partialorder %v326, %v398
        %vm405 = vcmp.eq.f32.partialorder %v327, %v383
        %vm406 = vcmp.eq.f32.partialorder %v328, %v398
        %vm407 = vcmp.eq.f32.partialorder %v329, %v383
        %vm408 = vcmp.eq.f32.partialorder %v330, %v398
        %vm409 = vcmp.eq.f32.partialorder %v331, %v383
        %vm410 = vcmp.eq.f32.partialorder %v332, %v398
        %vm411 = vcmp.eq.f32.partialorder %v333, %v383
        %vm412 = vcmp.eq.f32.partialorder %v334, %v398
        %vm413 = vcmp.eq.f32.partialorder %v335, %v383
        %vm414 = vcmp.eq.f32.partialorder %v336, %v398
        %vm415 = vcmp.eq.f32.partialorder %v337, %v383
        %vm416 = vcmp.eq.f32.partialorder %v338, %v398
        %v417 = vsel %vm399, %v359, 75.0
        %v418 = vsel %vm400, %v359, 75.0
        %v419 = vsel %vm401, %v360, 75.0
        %v420 = vsel %vm402, %v360, 75.0
        %v421 = vsel %vm403, %v361, 75.0
        %v422 = vsel %vm404, %v361, 75.0
        %v423 = vsel %vm405, %v362, 75.0
        %v424 = vsel %vm406, %v362, 75.0
        %v425 = vsel %vm407, %v363, 75.0
        %v426 = vsel %vm408, %v363, 75.0
        %v427 = vsel %vm409, %v364, 75.0
        %v428 = vsel %vm410, %v364, 75.0
        %v429 = vsel %vm411, %v365, 75.0
        %v430 = vsel %vm412, %v365, 75.0
        %v431 = vsel %vm413, %v366, 75.0
        %v432 = vsel %vm414, %v366, 75.0
        %v433 = vsel %vm415, %v367, 75.0
        %v434 = vsel %vm416, %v367, 75.0
        %v435 = vmin.f32 %v417, %v421
        %v436 = vmin.f32 %v419, %v423
        %v437 = vmin.f32 %v435, %v425
        %v438 = vmin.f32 %v436, %v427
        %v439 = vmin.f32 %v437, %v429
        %v440 = vmin.f32 %v438, %v431
        %v441 = vsel %vm374, %v433, inf
        %v442 = vmin.f32 %v439, %v441
        %v443 = vmin.f32 %v442, %v440
        %v444 = vrot.slane %v443, 4
        %v445 = vmin.f32 %v443, %v444
        %v446 = vrot.slane %v445, 2
        %v447 = vmin.f32 %v445, %v446
        %v448 = vrot.slane %v447, 1
        %v449 = vmin.f32 %v447, %v448
        %v450 = vmin.f32 %v418, %v422
        %v451 = vmin.f32 %v420, %v424
        %v452 = vmin.f32 %v450, %v426
        %v453 = vmin.f32 %v451, %v428
        %v454 = vmin.f32 %v452, %v430
        %v455 = vmin.f32 %v453, %v432
        %v456 = vsel %vm374, %v434, inf
        %v457 = vmin.f32 %v454, %v456
        %v458 = vmin.f32 %v457, %v455
        %v459 = vrot.slane %v458, 4
        %v460 = vmin.f32 %v458, %v459
        %v461 = vrot.slane %v460, 2
        %v462 = vmin.f32 %v460, %v461
        %v463 = vrot.slane %v462, 1
        %v464 = vmin.f32 %v462, %v463
        %vm465 = vcmp.ge.f32.partialorder %v339, 4.0
        %vm466 = vcmp.le.f32.partialorder %v339, 75.0
        %vm467 = vmand %vm465, %vm466
        %v468 = vld [vmem:[#allocation2] sm:$0x3]
        %v470 = vlaneseq
        %v471 = vshrl.u32 %v470, 7
        %v472 = vsub.s32 0, %v471
        %v473 = vrot.slane %v339, %v472
        %v474 = vlaneseq
        %v475 = vshrl.u32 %v474, 7
        %v476 = vsub.s32 1, %v475
        %v477 = vrot.slane %v339, %v476
        %v480 = vsub.f32 %v449, %v473
        %v481 = vsub.f32 %v464, %v477
        %v482 = vand.u32 2147483647, %v480
        %v483 = vand.u32 2147483647, %v481
        %v486 = vcombine.low %v482, %v483
        %v488 = vunpack.c.l.s4 1966171168
        %v489 = vunpack.c.0.s8 %v488
        %v490 = vlaneseq
        %v491 = vshrl.u32 %v490, 7
        %v492 = vsub.s32 %v489, %v491
        %v493 = vrot.slane %v486, %v492
        %v495 = vunpack.c.l.s4 1966171168
        %v496 = vunpack.c.0.s8 %v495
        %v497 = vlaneseq
        %v498 = vshrl.u32 %v497, 7
        %v499 = vsub.s32 %v496, %v498
        %v500 = vrot.slane %v493, %v499
        %v502 = vsel %vm467, %v500, 0.0
        %v503 = vadd.f32 %v468, %v502
        %v504 = vlaneseq
        %vm505 = vcmp.ge.s32.totalorder %v504, 0
        %vm506 = vcmp.lt.s32.totalorder %v504, 256
        %vm507 = vmand %vm505, %vm506
        %508 = vst.msk [vmem:[#allocation2] sm:$0x3] %vm507, %v503
        %v509 = vld [vmem:[#allocation3] sm:$0x3]
        %v510 = vsel %vm467, 1.0, 0.0
        %v511 = vadd.f32 %v509, %v510
        %512 = vst.msk [vmem:[#allocation3] sm:$0x3] %vm507, %v511
      $region36: #{tpu_custom_call.1} parent=27 // pred_fallthru
        _
      // Predicated region
      $region37: #{tpu_custom_call.1} parent=27 // pred_check
        %p513 = pneg %p306
      $region38: #{tpu_custom_call.1} parent=27 // pred_check_branch
        %515 = sbr.rel (%p513) target = $region40
      $region39: #{tpu_custom_call.1} parent=27 // pred_region
        %v516 = vld [vmem:[#allocation2] sm:$0x3]
        %v518 = vlaneseq
        %v519 = vshrl.u32 %v518, 7
        %v520 = vsub.s32 0, %v519
        %v521 = vrot.slane %v516, %v520
        %v522 = vlaneseq
        %v523 = vshrl.u32 %v522, 7
        %v524 = vsub.s32 1, %v523
        %v525 = vrot.slane %v516, %v524
        %vm528 = vcmask 1040384
        %v529 = vsel %vm528, %v521, 0.0
        %v530 = vsel %vm528, %v525, 0.0
        %v531 = vadd.f32 %v529, %v530
        %532 = vadd.xlane.f32.xlu0 %v531
        %v533 = vpop.xlane.xlu0 %532
        %v534 = vrot.slane %v533, 4
        %v535 = vadd.f32 %v533, %v534
        %v536 = vrot.slane %v535, 2
        %v537 = vadd.f32 %v535, %v536
        %v538 = vrot.slane %v537, 1
        %v539 = vadd.f32 %v537, %v538
        %s540 = vtos %v539
        %v541 = vstv %s540
        %vm542 = vcmask 0
        %543 = vst.msk [vmem:[%s298] sm:$0x1] %vm542, %v541
        %v544 = vld [vmem:[#allocation3] sm:$0x3]
        %v546 = vlaneseq
        %v547 = vshrl.u32 %v546, 7
        %v548 = vsub.s32 0, %v547
        %v549 = vrot.slane %v544, %v548
        %v550 = vlaneseq
        %v551 = vshrl.u32 %v550, 7
        %v552 = vsub.s32 1, %v551
        %v553 = vrot.slane %v544, %v552
        %v556 = vsel %vm528, %v549, 0.0
        %v557 = vsel %vm528, %v553, 0.0
        %v558 = vadd.f32 %v556, %v557
        %559 = vadd.xlane.f32.xlu0 %v558
        %v560 = vpop.xlane.xlu0 %559
        %v561 = vrot.slane %v560, 4
        %v562 = vadd.f32 %v560, %v561
        %v563 = vrot.slane %v562, 2
        %v564 = vadd.f32 %v562, %v563
        %v565 = vrot.slane %v564, 1
        %v566 = vadd.f32 %v564, %v565
        %s567 = vtos %v566
        %v568 = vstv %s567
        %569 = vst.msk [vmem:[%s305] sm:$0x1] %vm542, %v568
      $region40: #{tpu_custom_call.1} parent=27 // pred_fallthru
        _
      %p570 = scmp.lt.s32.totalorder %s20, 1
      %s571 = scalar_select %p570, %s20, 1
      %p572 = scmp.lt.s32.totalorder %s21, 1
      %s573 = scalar_select %p572, %s21, 1
      %s574 = smul.addr %s571, 2
      %s575 = sadd.s32 %s573, %s574
      %s576 = scalar_lea.vmem %s2, %s575
      %p577 = scmp.lt.s32.totalorder %s20, 1
      %s578 = scalar_select %p577, %s20, 1
      %p579 = scmp.lt.s32.totalorder %s21, 1
      %s580 = scalar_select %p579, %s21, 1
      %s581 = smul.addr %s578, 2
      %s582 = sadd.s32 %s580, %s581
      %s583 = scalar_lea.vmem %s3, %s582
      // Predicated region
      $region41: #{tpu_custom_call.1} parent=27 // pred_check
        %p584 = pneg %p122
      $region42: #{tpu_custom_call.1} parent=27 // pred_check_branch
        %586 = sbr.rel (%p584) target = $region44
      $region43: #{tpu_custom_call.1} parent=27 // pred_region
        _
      $region44: #{tpu_custom_call.1} parent=27 // pred_fallthru
        _
      // Predicated region
      $region45: #{tpu_custom_call.1} parent=27 // pred_check
        %p587 = pneg %p150
      $region46: #{tpu_custom_call.1} parent=27 // pred_check_branch
        %589 = sbr.rel (%p587) target = $region48
      $region47: #{tpu_custom_call.1} parent=27 // pred_region
        _
      $region48: #{tpu_custom_call.1} parent=27 // pred_fallthru
        _
    $region28: #{tpu_custom_call.1} parent=5 // pred_fallthru
      _
    %p590 = scmp.le.s32.totalorder 2, %s10
    // Predicated region
    $region49: #{tpu_custom_call.1} parent=5 // pred_check
      %p591 = pneg %p590
    $region50: #{tpu_custom_call.1} parent=5 // pred_check_branch
      %593 = sbr.rel (%p591) target = $region52
    $region51: #{tpu_custom_call.1} parent=5 // pred_region
      %s594 = ssub.s32 %s10, 2
      // Predicated region
      $region53: #{tpu_custom_call.1} parent=51 // pred_check
        %p595 = pneg %p128
      $region54: #{tpu_custom_call.1} parent=51 // pred_check_branch
        %597 = sbr.rel (%p595) target = $region56
      $region55: #{tpu_custom_call.1} parent=51 // pred_region
        %p598 = scmp.lt.s32.totalorder %s23, 1
        %s599 = scalar_select %p598, %s23, 1
        %p600 = scmp.lt.s32.totalorder %s24, 1
        %s601 = scalar_select %p600, %s24, 1
        %s602 = smul.addr %s599, 2
        %s603 = sadd.s32 %s601, %s602
        %s604 = scalar_lea.vmem %s2, %s603
      $region56: #{tpu_custom_call.1} parent=51 // pred_fallthru
        _
      // Predicated region
      $region57: #{tpu_custom_call.1} parent=51 // pred_check
        %p605 = pneg %p156
      $region58: #{tpu_custom_call.1} parent=51 // pred_check_branch
        %607 = sbr.rel (%p605) target = $region60
      $region59: #{tpu_custom_call.1} parent=51 // pred_region
        %p608 = scmp.lt.s32.totalorder %s23, 1
        %s609 = scalar_select %p608, %s23, 1
        %p610 = scmp.lt.s32.totalorder %s24, 1
        %s611 = scalar_select %p610, %s24, 1
        %s612 = smul.addr %s609, 2
        %s613 = sadd.s32 %s611, %s612
        %s614 = scalar_lea.vmem %s3, %s613
      $region60: #{tpu_custom_call.1} parent=51 // pred_fallthru
        _
    $region52: #{tpu_custom_call.1} parent=5 // pred_fallthru
      _
  $region6: #{tpu_custom_call.1} parent=0 // loop_footer
    %s14 = sadd.s32 1, %s10
  $region7: #{tpu_custom_call.1} parent=0 // loop_footer_branch
    %9 = sbr.rel target = $region3
  $region8: #{tpu_custom_call.1} parent=0 // loop_exit
    _

</llo_original>
